<compile_context>
chip_gen: v7x
topology: tpu7x:2x2x1
jax: 0.10.0
libtpu: 0.0.40
codegen_flags: <defaults>
</compile_context>

<pallas_src>
import functools
import math

import jax
import jax.numpy as jnp
from jax.experimental import pallas as pl
from jax.experimental.pallas import tpu as pltpu


def _dice_sums_kernel(x_ref, y_ref, inter_ref, denom_ref, *, cols, tile_c,
                      needs_mask):
    j = pl.program_id(1)          # column (reduction) axis, "arbitrary"

    @pl.when(j == 0)
    def _():
        inter_ref[...] = jnp.zeros_like(inter_ref)
        denom_ref[...] = jnp.zeros_like(denom_ref)

    x = x_ref[...].astype(jnp.float32)
    y = y_ref[...].astype(jnp.float32)

    def accumulate(xv, yv):
        # Per-step XLU lane reduction into the tiny resident output blocks:
        # no full-width accumulator load/store in the hot loop.
        inter_ref[...] += jnp.sum(xv * yv, axis=-1, keepdims=True)
        denom_ref[...] += jnp.sum(xv + yv, axis=-1, keepdims=True)

    if needs_mask:
        # Only the final column tile can be ragged; gate the masking so the
        # iota/compare/select cost is not paid on every step.
        is_last = j == pl.num_programs(1) - 1

        @pl.when(jnp.logical_not(is_last))
        def _():
            accumulate(x, y)

        @pl.when(is_last)
        def _():
            col = j * tile_c + jax.lax.broadcasted_iota(jnp.int32, x.shape, 1)
            valid = col < cols
            # Select-mask BEFORE any arithmetic: the out-of-bounds tail of the
            # block contains unspecified bytes (possibly NaNs).
            accumulate(jnp.where(valid, x, 0.0), jnp.where(valid, y, 0.0))
    else:
        accumulate(x, y)


def _choose_row_split(nc, hw):
    """Smallest k with hw % k == 0 and (nc * k) % 8 == 0 (sublane fill)."""
    if nc % 8 == 0 or hw <= 1:
        return 1
    for k in range(1, min(hw, 64) + 1):
        if hw % k == 0 and (nc * k) % 8 == 0:
            return k
    return 1


def _choose_row_tile(rows, max_rows=1024):
    """Row-block large row counts: largest multiple-of-8 divisor <= max_rows."""
    if rows <= max_rows or rows % 8 != 0:
        return rows
    for tile in range(max_rows - (max_rows % 8), 7, -8):
        if rows % tile == 0:
            return tile
    return rows


def dice_coef(x, y, *, epsilon=1e-5, return_score_per_channel=False,
              target_block_bytes=None):
    """Pallas TPU equivalent of DiceCoef.forward(input, target)."""
    assert x.shape == y.shape, "'input' and 'target' must have the same shape"
    assert x.ndim >= 2
    N, C = x.shape[0], x.shape[1]
    HW = int(math.prod(x.shape[2:]))          # product over spatial dims (1 if none)
    NC = N * C

    # --- generation-aware VMEM budget -------------------------------------
    try:
        vmem_cap = int(pltpu.get_tpu_info().vmem_capacity_bytes)
    except Exception:
        vmem_cap = 64 * 1024 * 1024           # conservative (v7x-sized) fallback
    if target_block_bytes is None:
        # ~4x block live at once (2 inputs x double-buffer) + headroom.
        target_block_bytes = max(512 * 1024, min(16 * 1024 * 1024, vmem_cap // 8))

    # --- free, view-only reshapes ------------------------------------------
    # (N, C, *spatial) -> (N*C*k, HW//k); k fills the sublane dim when NC is
    # not a multiple of 8.  No transpose, no pad.
    k = _choose_row_split(NC, HW)
    rows, cols = NC * k, HW // k
    xr = x.reshape(rows, cols)
    yr = y.reshape(rows, cols)

    dtype_bytes = max(jnp.dtype(x.dtype).itemsize, jnp.dtype(y.dtype).itemsize)

    # --- tile sizing ---------------------------------------------------------
    tile_r = _choose_row_tile(rows)
    lanes_budget = max(
        128, (target_block_bytes // max(1, tile_r * dtype_bytes)) // 128 * 128)
    tile_c = cols if cols <= lanes_budget else lanes_budget
    num_row_tiles = pl.cdiv(rows, tile_r)
    num_col_tiles = pl.cdiv(cols, tile_c)
    needs_mask = (cols % tile_c) != 0

    block_bytes = tile_r * tile_c * dtype_bytes
    vmem_limit = max(
        16 * 1024 * 1024,
        min(vmem_cap * 3 // 4, 6 * block_bytes + 4 * 1024 * 1024))

    kernel = functools.partial(_dice_sums_kernel, cols=cols, tile_c=tile_c,
                               needs_mask=needs_mask)

    inter_rows, denom_rows = pl.pallas_call(
        kernel,
        out_shape=(
            jax.ShapeDtypeStruct((rows, 1), jnp.float32),
            jax.ShapeDtypeStruct((rows, 1), jnp.float32),
        ),
        grid_spec=pltpu.PrefetchScalarGridSpec(
            num_scalar_prefetch=0,
            grid=(num_row_tiles, num_col_tiles),
            in_specs=[
                pl.BlockSpec((tile_r, tile_c), lambda i, j: (i, j)),
                pl.BlockSpec((tile_r, tile_c), lambda i, j: (i, j)),
            ],
            out_specs=[
                pl.BlockSpec((tile_r, 1), lambda i, j: (i, 0)),
                pl.BlockSpec((tile_r, 1), lambda i, j: (i, 0)),
            ],
        ),
        compiler_params=pltpu.CompilerParams(
            dimension_semantics=("parallel", "arbitrary"),
            vmem_limit_bytes=int(vmem_limit),
        ),
    )(xr, yr)

    # Tiny final combine (O(N*C*k) values): fold the batch and row-split
    # partials per channel, apply the dice formula, reduce to the mean.
    inter_c = jnp.sum(inter_rows.reshape(N, C, k), axis=(0, 2))
    denom_c = jnp.sum(denom_rows.reshape(N, C, k), axis=(0, 2))
    dice = (2.0 * inter_c + epsilon) / (denom_c + epsilon)
    if return_score_per_channel:
        return dice
    return jnp.mean(dice)


def _dice_coef_ref(x, y, epsilon=1e-5, return_score_per_channel=False):
    """Pure-JAX reference mirroring the PyTorch module."""
    C = x.shape[1]
    axis_order = (1, 0) + tuple(range(2, x.ndim))
    xf = jnp.transpose(x, axis_order).reshape(C, -1).astype(jnp.float32)
    yf = jnp.transpose(y, axis_order).reshape(C, -1).astype(jnp.float32)
    inter = jnp.sum(xf * yf, axis=-1)
    denom = jnp.sum(xf + yf, axis=-1)
    dice = (2.0 * inter + epsilon) / (denom + epsilon)
    return dice if return_score_per_channel else jnp.mean(dice)


if __name__ == "__main__":
    key = jax.random.PRNGKey(0)
    k1, k2, k3, k4, k5, k6 = jax.random.split(key, 6)

    # (N, C, H, W) — e.g. sigmoid probabilities and a binary mask.
    x = jax.nn.sigmoid(jax.random.normal(k1, (2, 4, 16, 16), dtype=jnp.float32))
    y = (jax.random.uniform(k2, (2, 4, 16, 16)) > 0.5).astype(jnp.float32)

    out = jax.block_until_ready(dice_coef(x, y))
    ref = _dice_coef_ref(x, y)
    assert jnp.allclose(out, ref, atol=1e-5, rtol=1e-4), (out, ref)

    out_pc = jax.block_until_ready(dice_coef(x, y, return_score_per_channel=True))
    ref_pc = _dice_coef_ref(x, y, return_score_per_channel=True)
    assert jnp.allclose(out_pc, ref_pc, atol=1e-5, rtol=1e-4), (out_pc, ref_pc)

    # Ragged spatial extent + tiny block budget: multi-tile path with the
    # masked (and pl.when-gated) last column tile.
    x2 = jax.nn.sigmoid(jax.random.normal(k3, (2, 4, 16, 17), dtype=jnp.float32))
    y2 = (jax.random.uniform(k4, (2, 4, 16, 17)) > 0.5).astype(jnp.float32)
    out2 = jax.block_until_ready(dice_coef(x2, y2, target_block_bytes=4096))
    ref2 = _dice_coef_ref(x2, y2)
    assert jnp.allclose(out2, ref2, atol=1e-5, rtol=1e-4), (out2, ref2)

    # N*C not a multiple of 8: exercises the sublane-fill row split (k > 1).
    x3 = jax.nn.sigmoid(jax.random.normal(k5, (1, 3, 8, 8), dtype=jnp.float32))
    y3 = (jax.random.uniform(k6, (1, 3, 8, 8)) > 0.5).astype(jnp.float32)
    out3 = jax.block_until_ready(dice_coef(x3, y3))
    ref3 = _dice_coef_ref(x3, y3)
    assert jnp.allclose(out3, ref3, atol=1e-5, rtol=1e-4), (out3, ref3)

    print("KERNEL_OK")
</pallas_src>

<mosaic_0001>
module attributes {stable_mosaic.version = 11 : i64} {
  func.func @_dice_sums_kernel(%arg0: i32, %arg1: i32, %arg2: memref<8x256xf32, #tpu.memory_space<vmem>>, %arg3: memref<8x256xf32, #tpu.memory_space<vmem>>, %arg4: memref<8x1xf32, #tpu.memory_space<vmem>>, %arg5: memref<8x1xf32, #tpu.memory_space<vmem>>) attributes {dimension_semantics = [#tpu.dimension_semantics<parallel>, #tpu.dimension_semantics<arbitrary>], iteration_bounds = array<i64: 1, 1>, scalar_prefetch = 0 : i64, scratch_operands = 0 : i64, tpu.core_type = #tpu.core_type<tc>, window_params = [{transform_indices = @transform_0, window_bounds = array<i64: 8, 256>}, {transform_indices = @transform_1, window_bounds = array<i64: 8, 256>}, {transform_indices = @transform_2, window_bounds = array<i64: 8, 1>}, {transform_indices = @transform_3, window_bounds = array<i64: 8, 1>}]} {
    %c0_i32 = arith.constant 0 : i32
    %0 = arith.cmpi eq, %arg1, %c0_i32 : i32
    %1 = arith.extui %0 : i1 to i32
    %c0_i32_0 = arith.constant 0 : i32
    %2 = arith.cmpi ne, %1, %c0_i32_0 : i32
    scf.if %2 {
      %cst_13 = arith.constant 0.000000e+00 : f32
      %17 = vector.broadcast %cst_13 : f32 to vector<8x1xf32>
      %c0_14 = arith.constant 0 : index
      %c0_15 = arith.constant 0 : index
      %18 = vector.load %arg4[%c0_14, %c0_15] : memref<8x1xf32, #tpu.memory_space<vmem>>, vector<8x1xf32>
      tpu.vector_store %arg4[%c0_14, %c0_15], %17 {strides = array<i32>} : memref<8x1xf32, #tpu.memory_space<vmem>>, vector<8x1xf32>,
      %cst_16 = arith.constant 0.000000e+00 : f32
      %19 = vector.broadcast %cst_16 : f32 to vector<8x1xf32>
      %c0_17 = arith.constant 0 : index
      %c0_18 = arith.constant 0 : index
      %20 = vector.load %arg5[%c0_17, %c0_18] : memref<8x1xf32, #tpu.memory_space<vmem>>, vector<8x1xf32>
      tpu.vector_store %arg5[%c0_17, %c0_18], %19 {strides = array<i32>} : memref<8x1xf32, #tpu.memory_space<vmem>>, vector<8x1xf32>,
    } else {
    }
    %c0 = arith.constant 0 : index
    %c0_1 = arith.constant 0 : index
    %3 = vector.load %arg2[%c0, %c0_1] : memref<8x256xf32, #tpu.memory_space<vmem>>, vector<8x256xf32>
    %c0_2 = arith.constant 0 : index
    %c0_3 = arith.constant 0 : index
    %4 = vector.load %arg3[%c0_2, %c0_3] : memref<8x256xf32, #tpu.memory_space<vmem>>, vector<8x256xf32>
    %c0_4 = arith.constant 0 : index
    %c0_5 = arith.constant 0 : index
    %5 = vector.load %arg4[%c0_4, %c0_5] : memref<8x1xf32, #tpu.memory_space<vmem>>, vector<8x1xf32>
    %6 = arith.mulf %3, %4 : vector<8x256xf32>
    %cst = arith.constant dense<0.000000e+00> : vector<8xf32>
    %7 = vector.multi_reduction <add>, %6, %cst [1] : vector<8x256xf32> to vector<8xf32>
    %8 = vector.shape_cast %7 : vector<8xf32> to vector<8x1xf32>
    %9 = arith.addf %5, %8 : vector<8x1xf32>
    %c0_6 = arith.constant 0 : index
    %c0_7 = arith.constant 0 : index
    %10 = vector.load %arg4[%c0_6, %c0_7] : memref<8x1xf32, #tpu.memory_space<vmem>>, vector<8x1xf32>
    tpu.vector_store %arg4[%c0_6, %c0_7], %9 {strides = array<i32>} : memref<8x1xf32, #tpu.memory_space<vmem>>, vector<8x1xf32>,
    %c0_8 = arith.constant 0 : index
    %c0_9 = arith.constant 0 : index
    %11 = vector.load %arg5[%c0_8, %c0_9] : memref<8x1xf32, #tpu.memory_space<vmem>>, vector<8x1xf32>
    %12 = arith.addf %3, %4 : vector<8x256xf32>
    %cst_10 = arith.constant dense<0.000000e+00> : vector<8xf32>
    %13 = vector.multi_reduction <add>, %12, %cst_10 [1] : vector<8x256xf32> to vector<8xf32>
    %14 = vector.shape_cast %13 : vector<8xf32> to vector<8x1xf32>
    %15 = arith.addf %11, %14 : vector<8x1xf32>
    %c0_11 = arith.constant 0 : index
    %c0_12 = arith.constant 0 : index
    %16 = vector.load %arg5[%c0_11, %c0_12] : memref<8x1xf32, #tpu.memory_space<vmem>>, vector<8x1xf32>
    tpu.vector_store %arg5[%c0_11, %c0_12], %15 {strides = array<i32>} : memref<8x1xf32, #tpu.memory_space<vmem>>, vector<8x1xf32>,
    return
  }
  func.func @transform_0(%arg0: i32, %arg1: i32) -> (i32, i32) {
    %c0_i32 = arith.constant 0 : i32
    return %arg0, %arg1 : i32, i32
  }
  func.func @transform_1(%arg0: i32, %arg1: i32) -> (i32, i32) {
    %c0_i32 = arith.constant 0 : i32
    return %arg0, %arg1 : i32, i32
  }
  func.func @transform_2(%arg0: i32, %arg1: i32) -> (i32, i32) {
    %c0_i32 = arith.constant 0 : i32
    %c0_i32_0 = arith.constant 0 : i32
    return %arg0, %c0_i32 : i32, i32
  }
  func.func @transform_3(%arg0: i32, %arg1: i32) -> (i32, i32) {
    %c0_i32 = arith.constant 0 : i32
    %c0_i32_0 = arith.constant 0 : i32
    return %arg0, %c0_i32 : i32, i32
  }
}

</mosaic_0001>

<llo_original>
// kernel: tpu_custom_call.1
$region0: #{tpu_custom_call.1}
  #allocation0 [shape = 'u32[]', space=smem, size = 0x4, offset = 0x4, fixed_abs, tag = 'smem constant byte address 0x4 - core index']
  #allocation1 [shape = 'u32[144,128]{1,0:T(1,128)}', space=vmem, size = 0x12000, scoped, tag = 'internal scratch']
  %s0 = inlined_call_operand.hbm [shape: f32[8,256], index: 0, kind: input, shape index: {}]
  %s1 = inlined_call_operand.hbm [shape: f32[8,256], index: 1, kind: input, shape index: {}]
  %s2 = inlined_call_operand.vmem [shape: f32[8,1], index: 2, kind: output, shape index: {0}]
  %s3 = inlined_call_operand.vmem [shape: f32[8,1], index: 3, kind: output, shape index: {1}]
  %4 = xla_tuple %s2, %s3
  %s5 = sld [smem:[#allocation0]]
  $region38: #{tpu_custom_call.1} parent=0
    _
  %s7 = ssub.s32 1, %s5
  %s8 = scalar_select 0, %s7, %s5
  $region1: #{tpu_custom_call.1} parent=0
    #allocation2 [shape = 'u8[8192]{0}', space=vmem, size = 0x2000, scoped, tag = 'input window, operand 0, single buffered']
    #allocation3 [shape = 's32[1]{0}', space=sflag, size = 0x4, scoped, tag = 'scoped memory for tpu_custom_call.1']
    #allocation4 [shape = 'u8[8192]{0}', space=vmem, size = 0x2000, scoped, tag = 'input window, operand 1, single buffered']
    #allocation5 [shape = 's32[1]{0}', space=sflag, size = 0x4, scoped, tag = 'scoped memory for tpu_custom_call.1']
    %9 = vsyncpa [#allocation3], 0
    %10 = vsyncpa [#allocation5], 0
    // Predicated region
    $region2: #{tpu_custom_call.1} parent=1 // pred_check
      _
    $region3: #{tpu_custom_call.1} parent=1 // pred_check_branch
      %12 = sbr.rel (0) target = $region5
    $region4: #{tpu_custom_call.1} parent=1 // pred_region
      %s14 = ssub.s32 256, 256
      %15 = vsyncadd [#allocation3], %s14
      %s17 = sshll.u32 [#allocation2], 4
      %s18 = int_to_ptr.vmem [resolvable:$true] %s17
      %20 = dma.hbm_to_vmem [thread:$0]  %s0, 256, %s18, [#allocation3]
    $region5: #{tpu_custom_call.1} parent=1 // pred_fallthru
      _
    // Predicated region
    $region6: #{tpu_custom_call.1} parent=1 // pred_check
      _
    $region7: #{tpu_custom_call.1} parent=1 // pred_check_branch
      %22 = sbr.rel (0) target = $region9
    $region8: #{tpu_custom_call.1} parent=1 // pred_region
      %s24 = ssub.s32 256, 256
      %25 = vsyncadd [#allocation5], %s24
      %s27 = sshll.u32 [#allocation4], 4
      %s28 = int_to_ptr.vmem [resolvable:$true] %s27
      %30 = dma.hbm_to_vmem [thread:$0]  %s1, 256, %s28, [#allocation5]
    $region9: #{tpu_custom_call.1} parent=1 // pred_fallthru
      _
    // Predicated region
    $region10: #{tpu_custom_call.1} parent=1 // pred_check
      _
    $region11: #{tpu_custom_call.1} parent=1 // pred_check_branch
      %32 = sbr.rel (0) target = $region13
    $region12: #{tpu_custom_call.1} parent=1 // pred_region
      %33 = dma.done [#allocation3], 256
    $region13: #{tpu_custom_call.1} parent=1 // pred_fallthru
      _
    // Predicated region
    $region14: #{tpu_custom_call.1} parent=1 // pred_check
      _
    $region15: #{tpu_custom_call.1} parent=1 // pred_check_branch
      %35 = sbr.rel (0) target = $region17
    $region16: #{tpu_custom_call.1} parent=1 // pred_region
      %36 = dma.done [#allocation5], 256
    $region17: #{tpu_custom_call.1} parent=1 // pred_fallthru
      _
    %p37 = scmp.eq.s32.totalorder 0, 0
    // Predicated region
    $region18: #{tpu_custom_call.1} parent=1 // pred_check
      %p38 = pneg %p37
    $region19: #{tpu_custom_call.1} parent=1 // pred_check_branch
      %40 = sbr.rel (%p38) target = $region21
    $region20: #{tpu_custom_call.1} parent=1 // pred_region
      %vm41 = vcmask 7168
      %42 = vst.msk [vmem:[%s2] sm:$0xff] %vm41, 0.0
      %43 = vst.msk [vmem:[%s3] sm:$0xff] %vm41, 0.0
    $region21: #{tpu_custom_call.1} parent=1 // pred_fallthru
      _
    %v44 = vld [vmem:[#allocation2] sm:$0xff]
    %v45 = vld [vmem:[#allocation2 + $0x8] sm:$0xff]
    %v46 = vld [vmem:[#allocation4] sm:$0xff]
    %v47 = vld [vmem:[#allocation4 + $0x8] sm:$0xff]
    %v48 = vld [vmem:[%s2] sm:$0xff]
    %v49 = vmul.f32 %v44, %v46
    %v50 = vmul.f32 %v45, %v47
    %v51 = vadd.f32 %v49, %v50
    %52 = vadd.xlane.f32.xlu0 %v51
    %v53 = vpop.xlane.xlu0 %52
    %v54 = vadd.f32 %v48, %v53
    %vm55 = vcmask 7168
    %56 = vst.msk [vmem:[%s2] sm:$0xff] %vm55, %v54
    %v57 = vld [vmem:[%s3] sm:$0xff]
    %v58 = vadd.f32 %v44, %v46
    %v59 = vadd.f32 %v45, %v47
    %v60 = vadd.f32 %v58, %v59
    %61 = vadd.xlane.f32.xlu0 %v60
    %v62 = vpop.xlane.xlu0 %61
    %v63 = vadd.f32 %v57, %v62
    %64 = vst.msk [vmem:[%s3] sm:$0xff] %vm55, %v63
    // Predicated region
    $region22: #{tpu_custom_call.1} parent=1 // pred_check
      _
    $region23: #{tpu_custom_call.1} parent=1 // pred_check_branch
      %66 = sbr.rel (0) target = $region25
    $region24: #{tpu_custom_call.1} parent=1 // pred_region
      _
    $region25: #{tpu_custom_call.1} parent=1 // pred_fallthru
      _
    // Predicated region
    $region26: #{tpu_custom_call.1} parent=1 // pred_check
      _
    $region27: #{tpu_custom_call.1} parent=1 // pred_check_branch
      %68 = sbr.rel (0) target = $region29
    $region28: #{tpu_custom_call.1} parent=1 // pred_region
      _
    $region29: #{tpu_custom_call.1} parent=1 // pred_fallthru
      _
    // Predicated region
    $region30: #{tpu_custom_call.1} parent=1 // pred_check
      _
    $region31: #{tpu_custom_call.1} parent=1 // pred_check_branch
      %70 = sbr.rel (0) target = $region33
    $region32: #{tpu_custom_call.1} parent=1 // pred_region
      _
    $region33: #{tpu_custom_call.1} parent=1 // pred_fallthru
      _
    // Predicated region
    $region34: #{tpu_custom_call.1} parent=1 // pred_check
      _
    $region35: #{tpu_custom_call.1} parent=1 // pred_check_branch
      %72 = sbr.rel (0) target = $region37
    $region36: #{tpu_custom_call.1} parent=1 // pred_region
      _
    $region37: #{tpu_custom_call.1} parent=1 // pred_fallthru
      _
    %73 = vsyncpa [#allocation3], 1
    %74 = vsyncpa [#allocation5], 1

</llo_original>
